<compile_context>
chip_gen: v7x
topology: tpu7x:2x2x1
jax: 0.10.0
libtpu: 0.0.40
codegen_flags: <defaults>
</compile_context>

<pallas_src>
import functools

import jax
import jax.numpy as jnp
from jax.experimental import pallas as pl
from jax.experimental.pallas import tpu as pltpu

BN_EPS = 1e-5
LANE = 128


def _round_up(n, m):
    return ((n + m - 1) // m) * m


def _pad2d(a, rows, cols):
    return jnp.pad(a, ((0, rows - a.shape[0]), (0, cols - a.shape[1])))


# ---------------------------------------------------------------------------
# Kernel: one batch tile through 4x (matmul + bias [+ ReLU]).
# Weights are bf16 (MXU operands), biases f32; accumulation is f32.
# ---------------------------------------------------------------------------
def batch_net_kernel(x_ref,
                     w1_ref, b1_ref, w2_ref, b2_ref,
                     w3_ref, b3_ref, w4_ref, b4_ref,
                     out_ref):
    def linear(h_bf16, w_ref, b_ref):
        return jnp.dot(h_bf16, w_ref[...],
                       preferred_element_type=jnp.float32) + b_ref[...]

    # Cast the input tile to bf16 in VMEM (no wrapper-side pad/cast HBM pass).
    h = x_ref[...].astype(jnp.bfloat16)
    # BN (eval, running stats) is pre-folded into w/b: each hidden layer is
    # matmul (MXU, f32 accum) + bias + ReLU (f32 VPU) -> bf16.
    h = jnp.maximum(linear(h, w1_ref, b1_ref), 0.0).astype(jnp.bfloat16)
    h = jnp.maximum(linear(h, w2_ref, b2_ref), 0.0).astype(jnp.bfloat16)
    h = jnp.maximum(linear(h, w3_ref, b3_ref), 0.0).astype(jnp.bfloat16)
    # TODO(synk): Dropout(0.3) after each ReLU is identity in eval mode; training-mode dropout / batch-stat BN not emitted.
    out_ref[...] = linear(h, w4_ref, b4_ref).astype(out_ref.dtype)


# ---------------------------------------------------------------------------
# One-time parameter preparation: fold BN, pad lane dims to 128, cast W to bf16.
# ---------------------------------------------------------------------------
def prepare_params(params):
    """Returns (prepped_dict, out_dim). Weights stored as [in, out] (PyTorch W^T)."""
    in_dim = params["w1"].shape[0]
    dims = [in_dim]
    folded = []
    for li in range(1, 5):
        w = params[f"w{li}"].astype(jnp.float32)
        b = params[f"b{li}"].astype(jnp.float32)
        if li <= 3:  # fold eval-mode BatchNorm1d into the Linear
            scale = params[f"g{li}"] * jax.lax.rsqrt(params[f"v{li}"] + BN_EPS)
            w = w * scale
            b = (b - params[f"m{li}"]) * scale + params[f"be{li}"]
        folded.append((w, b))
        dims.append(w.shape[1])

    # Only the output (lane) dims are padded to 128; the layer-1 contracting
    # dim is left as-is (the x / w1 blocks cover it fully, so no (8,128)
    # tiling constraint applies and x HBM traffic is not inflated).
    pdims = [in_dim] + [_round_up(d, LANE) for d in dims[1:]]
    prepped = {}
    for li, (w, b) in enumerate(folded, start=1):
        prepped[f"w{li}"] = _pad2d(w, pdims[li - 1], pdims[li]).astype(jnp.bfloat16)
        prepped[f"b{li}"] = _pad2d(b, 1, pdims[li])  # stays f32
    return prepped, dims[-1]


# ---------------------------------------------------------------------------
# Forward wrapper: tile the batch with a 1-D grid, call the kernel, slice back.
# ---------------------------------------------------------------------------
@functools.partial(jax.jit, static_argnums=(2, 3))
def _forward_impl(x, prepped, out_dim, block_b):
    B = x.shape[0]
    x2d = x.reshape(B, -1)                      # x.view(x.size()[0], -1); metadata only
    in_dim = x2d.shape[1]
    out_p = prepped["w4"].shape[1]

    # ---- batch tile selection --------------------------------------------
    # * multiple of 16 (bf16 sublane packing of intermediate activations)
    # * as large as block_b allows (per-grid-step overhead dominates small tiles)
    # * keep >= 2 grid steps when the batch allows, so the "parallel" batch
    #   axis shards across the two TensorCores on v7x (no cost on v5e/v6e).
    tb = min(block_b, _round_up(B, 16))
    if B > 16 and pl.cdiv(B, tb) < 2:
        tb = _round_up(pl.cdiv(B, 2), 16)
    tb = max(16, (tb // 16) * 16)

    grid = (pl.cdiv(B, tb),)
    # NOTE: B need not be divisible by tb.  Pallas clips the trailing block:
    # out-of-bounds input rows are garbage fed through the MLP, but the
    # corresponding output rows are discarded on store, so the result is exact.

    def tile_spec(dim):
        return pl.BlockSpec((tb, dim), lambda i: (i, 0))

    def resident_spec(a):
        # Constant index map -> same block every grid step; weights/biases are
        # DMA'd once and stay VMEM-resident across the whole batch loop.
        return pl.BlockSpec(a.shape, lambda i: (0, 0))

    args = (x2d,
            prepped["w1"], prepped["b1"], prepped["w2"], prepped["b2"],
            prepped["w3"], prepped["b3"], prepped["w4"], prepped["b4"])
    in_specs = [tile_spec(in_dim)] + [resident_spec(a) for a in args[1:]]

    out = pl.pallas_call(
        batch_net_kernel,
        out_shape=jax.ShapeDtypeStruct((B, out_p), jnp.float32),
        grid=grid,
        in_specs=in_specs,
        out_specs=tile_spec(out_p),
        compiler_params=pltpu.CompilerParams(
            dimension_semantics=("parallel",)),
    )(*args)
    return out[:, :out_dim]


def batch_net_forward(x, prepped, out_dim, block_b=1024):
    return _forward_impl(x, prepped, out_dim, block_b)


# ---------------------------------------------------------------------------
# Synthetic params + pure-JAX references for the self-check.
# ---------------------------------------------------------------------------
def init_params(key, in_dim, h1, h2, h3, out_dim):
    """Deterministic synthetic params. Linear weights stored as [in, out]."""
    ks = jax.random.split(key, 24)
    p = {}
    dims = [(in_dim, h1), (h1, h2), (h2, h3), (h3, out_dim)]
    ki = 0
    for li, (din, dout) in enumerate(dims, start=1):
        scale = 1.0 / jnp.sqrt(jnp.float32(din))
        p[f"w{li}"] = jax.random.uniform(ks[ki], (din, dout), jnp.float32, -scale, scale); ki += 1
        p[f"b{li}"] = jax.random.uniform(ks[ki], (1, dout), jnp.float32, -scale, scale); ki += 1
        if li <= 3:  # BatchNorm params for layers 1-3 only
            p[f"g{li}"] = 1.0 + 0.1 * jax.random.normal(ks[ki], (1, dout), jnp.float32); ki += 1
            p[f"be{li}"] = 0.1 * jax.random.normal(ks[ki], (1, dout), jnp.float32); ki += 1
            p[f"m{li}"] = 0.05 * jax.random.normal(ks[ki], (1, dout), jnp.float32); ki += 1
            p[f"v{li}"] = 1.0 + 0.1 * jnp.abs(jax.random.normal(ks[ki], (1, dout), jnp.float32)); ki += 1
    return p


def reference_forward(x, p):
    """Pure-JAX f32 reference with the original module semantics (eval mode)."""
    h = x.reshape(x.shape[0], -1)
    for li in range(1, 4):
        h = h @ p[f"w{li}"] + p[f"b{li}"]
        h = (h - p[f"m{li}"]) * jax.lax.rsqrt(p[f"v{li}"] + BN_EPS) * p[f"g{li}"] + p[f"be{li}"]
        h = jnp.maximum(h, 0.0)
    return h @ p["w4"] + p["b4"]


def matched_reference(x, prepped, out_dim):
    """Pure-JAX reference using the exact folded/padded bf16 params the kernel sees."""
    B = x.shape[0]
    h = x.reshape(B, -1).astype(jnp.bfloat16)
    for li in range(1, 5):
        h32 = jnp.dot(h, prepped[f"w{li}"],
                      preferred_element_type=jnp.float32) + prepped[f"b{li}"]
        h = jnp.maximum(h32, 0.0).astype(jnp.bfloat16) if li < 4 else h32
    return h[:, :out_dim]


if __name__ == "__main__":
    # MLP-consistent small shapes: batch=256, in=64, hiddens=48/32/32, out=16.
    B, IN_DIM, H1, H2, H3, OUT = 256, 64, 48, 32, 32, 16

    key = jax.random.PRNGKey(0)
    kx, kp = jax.random.split(key)
    x = jax.random.normal(kx, (B, IN_DIM), jnp.float32)
    params = init_params(kp, IN_DIM, H1, H2, H3, OUT)

    prepped, out_dim = prepare_params(params)
    out = batch_net_forward(x, prepped, out_dim)
    out = jax.block_until_ready(out)
    assert out.shape == (B, OUT)

    # Tight check vs a pure-JAX reference doing the same folded bf16 math.
    ref_bf16 = matched_reference(x, prepped, out_dim)
    assert jnp.allclose(out, ref_bf16, atol=2e-3, rtol=2e-3), "mismatch vs matched bf16 reference"

    # Loose check vs the original f32 module semantics (only bf16 MXU rounding differs).
    ref_f32 = reference_forward(x, params)
    assert jnp.allclose(out, ref_f32, atol=5e-2, rtol=5e-2), "mismatch vs f32 module reference"

    print("KERNEL_OK")
</pallas_src>

<mosaic_0001>
module attributes {stable_mosaic.version = 11 : i64} {
  func.func @batch_net_kernel(%arg0: i32, %arg1: memref<128x64xf32, #tpu.memory_space<vmem>>, %arg2: memref<64x128xbf16, #tpu.memory_space<vmem>>, %arg3: memref<1x128xf32, #tpu.memory_space<vmem>>, %arg4: memref<128x128xbf16, #tpu.memory_space<vmem>>, %arg5: memref<1x128xf32, #tpu.memory_space<vmem>>, %arg6: memref<128x128xbf16, #tpu.memory_space<vmem>>, %arg7: memref<1x128xf32, #tpu.memory_space<vmem>>, %arg8: memref<128x128xbf16, #tpu.memory_space<vmem>>, %arg9: memref<1x128xf32, #tpu.memory_space<vmem>>, %arg10: memref<128x128xf32, #tpu.memory_space<vmem>>) attributes {dimension_semantics = [#tpu.dimension_semantics<parallel>], iteration_bounds = array<i64: 2>, scalar_prefetch = 0 : i64, scratch_operands = 0 : i64, tpu.core_type = #tpu.core_type<tc>, window_params = [{transform_indices = @transform_0, window_bounds = array<i64: 128, 64>}, {pipeline_mode = #tpu.pipeline_mode<synchronous>, transform_indices = @transform_1, window_bounds = array<i64: 64, 128>}, {pipeline_mode = #tpu.pipeline_mode<synchronous>, transform_indices = @transform_2, window_bounds = array<i64: 1, 128>}, {pipeline_mode = #tpu.pipeline_mode<synchronous>, transform_indices = @transform_3, window_bounds = array<i64: 128, 128>}, {pipeline_mode = #tpu.pipeline_mode<synchronous>, transform_indices = @transform_4, window_bounds = array<i64: 1, 128>}, {pipeline_mode = #tpu.pipeline_mode<synchronous>, transform_indices = @transform_5, window_bounds = array<i64: 128, 128>}, {pipeline_mode = #tpu.pipeline_mode<synchronous>, transform_indices = @transform_6, window_bounds = array<i64: 1, 128>}, {pipeline_mode = #tpu.pipeline_mode<synchronous>, transform_indices = @transform_7, window_bounds = array<i64: 128, 128>}, {pipeline_mode = #tpu.pipeline_mode<synchronous>, transform_indices = @transform_8, window_bounds = array<i64: 1, 128>}, {transform_indices = @transform_9, window_bounds = array<i64: 128, 128>}]} {
    %c0 = arith.constant 0 : index
    %c0_0 = arith.constant 0 : index
    %0 = vector.load %arg1[%c0, %c0_0] : memref<128x64xf32, #tpu.memory_space<vmem>>, vector<128x64xf32>
    %1 = arith.truncf %0 : vector<128x64xf32> to vector<128x64xbf16>
    %c0_1 = arith.constant 0 : index
    %c0_2 = arith.constant 0 : index
    %2 = vector.load %arg2[%c0_1, %c0_2] : memref<64x128xbf16, #tpu.memory_space<vmem>>, vector<64x128xbf16>
    %cst = arith.constant dense<0.000000e+00> : vector<128x128xf32>
    %3 = tpu.matmul %1, %2, %cst {dimension_numbers = #tpu.dot_dimension_numbers<[1], [0], [0], [1], [0, 0, 1, 1], [], []>} : vector<128x64xbf16>, vector<64x128xbf16>, vector<128x128xf32> -> vector<128x128xf32>
    %c0_3 = arith.constant 0 : index
    %c0_4 = arith.constant 0 : index
    %4 = vector.load %arg3[%c0_3, %c0_4] : memref<1x128xf32, #tpu.memory_space<vmem>>, vector<1x128xf32>
    %5 = vector.broadcast %4 : vector<1x128xf32> to vector<128x128xf32>
    %6 = arith.addf %3, %5 : vector<128x128xf32>
    %cst_5 = arith.constant 0.000000e+00 : f32
    %7 = vector.broadcast %cst_5 : f32 to vector<128x128xf32>
    %8 = arith.maximumf %6, %7 : vector<128x128xf32>
    %9 = arith.truncf %8 : vector<128x128xf32> to vector<128x128xbf16>
    %c0_6 = arith.constant 0 : index
    %c0_7 = arith.constant 0 : index
    %10 = vector.load %arg4[%c0_6, %c0_7] : memref<128x128xbf16, #tpu.memory_space<vmem>>, vector<128x128xbf16>
    %cst_8 = arith.constant dense<0.000000e+00> : vector<128x128xf32>
    %11 = tpu.matmul %9, %10, %cst_8 {dimension_numbers = #tpu.dot_dimension_numbers<[1], [0], [0], [1], [0, 0, 1, 1], [], []>} : vector<128x128xbf16>, vector<128x128xbf16>, vector<128x128xf32> -> vector<128x128xf32>
    %c0_9 = arith.constant 0 : index
    %c0_10 = arith.constant 0 : index
    %12 = vector.load %arg5[%c0_9, %c0_10] : memref<1x128xf32, #tpu.memory_space<vmem>>, vector<1x128xf32>
    %13 = vector.broadcast %12 : vector<1x128xf32> to vector<128x128xf32>
    %14 = arith.addf %11, %13 : vector<128x128xf32>
    %cst_11 = arith.constant 0.000000e+00 : f32
    %15 = vector.broadcast %cst_11 : f32 to vector<128x128xf32>
    %16 = arith.maximumf %14, %15 : vector<128x128xf32>
    %17 = arith.truncf %16 : vector<128x128xf32> to vector<128x128xbf16>
    %c0_12 = arith.constant 0 : index
    %c0_13 = arith.constant 0 : index
    %18 = vector.load %arg6[%c0_12, %c0_13] : memref<128x128xbf16, #tpu.memory_space<vmem>>, vector<128x128xbf16>
    %cst_14 = arith.constant dense<0.000000e+00> : vector<128x128xf32>
    %19 = tpu.matmul %17, %18, %cst_14 {dimension_numbers = #tpu.dot_dimension_numbers<[1], [0], [0], [1], [0, 0, 1, 1], [], []>} : vector<128x128xbf16>, vector<128x128xbf16>, vector<128x128xf32> -> vector<128x128xf32>
    %c0_15 = arith.constant 0 : index
    %c0_16 = arith.constant 0 : index
    %20 = vector.load %arg7[%c0_15, %c0_16] : memref<1x128xf32, #tpu.memory_space<vmem>>, vector<1x128xf32>
    %21 = vector.broadcast %20 : vector<1x128xf32> to vector<128x128xf32>
    %22 = arith.addf %19, %21 : vector<128x128xf32>
    %cst_17 = arith.constant 0.000000e+00 : f32
    %23 = vector.broadcast %cst_17 : f32 to vector<128x128xf32>
    %24 = arith.maximumf %22, %23 : vector<128x128xf32>
    %25 = arith.truncf %24 : vector<128x128xf32> to vector<128x128xbf16>
    %c0_18 = arith.constant 0 : index
    %c0_19 = arith.constant 0 : index
    %26 = vector.load %arg8[%c0_18, %c0_19] : memref<128x128xbf16, #tpu.memory_space<vmem>>, vector<128x128xbf16>
    %cst_20 = arith.constant dense<0.000000e+00> : vector<128x128xf32>
    %27 = tpu.matmul %25, %26, %cst_20 {dimension_numbers = #tpu.dot_dimension_numbers<[1], [0], [0], [1], [0, 0, 1, 1], [], []>} : vector<128x128xbf16>, vector<128x128xbf16>, vector<128x128xf32> -> vector<128x128xf32>
    %c0_21 = arith.constant 0 : index
    %c0_22 = arith.constant 0 : index
    %28 = vector.load %arg9[%c0_21, %c0_22] : memref<1x128xf32, #tpu.memory_space<vmem>>, vector<1x128xf32>
    %29 = vector.broadcast %28 : vector<1x128xf32> to vector<128x128xf32>
    %30 = arith.addf %27, %29 : vector<128x128xf32>
    %c0_23 = arith.constant 0 : index
    %c0_24 = arith.constant 0 : index
    %31 = vector.load %arg10[%c0_23, %c0_24] : memref<128x128xf32, #tpu.memory_space<vmem>>, vector<128x128xf32>
    tpu.vector_store %arg10[%c0_23, %c0_24], %30 {strides = array<i32>} : memref<128x128xf32, #tpu.memory_space<vmem>>, vector<128x128xf32>,
    return
  }
  func.func @transform_0(%arg0: i32) -> (i32, i32) {
    %c0_i32 = arith.constant 0 : i32
    %c0_i32_0 = arith.constant 0 : i32
    return %arg0, %c0_i32 : i32, i32
  }
  func.func @transform_1(%arg0: i32) -> (i32, i32) {
    %c0_i32 = arith.constant 0 : i32
    %c0_i32_0 = arith.constant 0 : i32
    %c0_i32_1 = arith.constant 0 : i32
    return %c0_i32, %c0_i32_0 : i32, i32
  }
  func.func @transform_2(%arg0: i32) -> (i32, i32) {
    %c0_i32 = arith.constant 0 : i32
    %c0_i32_0 = arith.constant 0 : i32
    %c0_i32_1 = arith.constant 0 : i32
    return %c0_i32, %c0_i32_0 : i32, i32
  }
  func.func @transform_3(%arg0: i32) -> (i32, i32) {
    %c0_i32 = arith.constant 0 : i32
    %c0_i32_0 = arith.constant 0 : i32
    %c0_i32_1 = arith.constant 0 : i32
    return %c0_i32, %c0_i32_0 : i32, i32
  }
  func.func @transform_4(%arg0: i32) -> (i32, i32) {
    %c0_i32 = arith.constant 0 : i32
    %c0_i32_0 = arith.constant 0 : i32
    %c0_i32_1 = arith.constant 0 : i32
    return %c0_i32, %c0_i32_0 : i32, i32
  }
  func.func @transform_5(%arg0: i32) -> (i32, i32) {
    %c0_i32 = arith.constant 0 : i32
    %c0_i32_0 = arith.constant 0 : i32
    %c0_i32_1 = arith.constant 0 : i32
    return %c0_i32, %c0_i32_0 : i32, i32
  }
  func.func @transform_6(%arg0: i32) -> (i32, i32) {
    %c0_i32 = arith.constant 0 : i32
    %c0_i32_0 = arith.constant 0 : i32
    %c0_i32_1 = arith.constant 0 : i32
    return %c0_i32, %c0_i32_0 : i32, i32
  }
  func.func @transform_7(%arg0: i32) -> (i32, i32) {
    %c0_i32 = arith.constant 0 : i32
    %c0_i32_0 = arith.constant 0 : i32
    %c0_i32_1 = arith.constant 0 : i32
    return %c0_i32, %c0_i32_0 : i32, i32
  }
  func.func @transform_8(%arg0: i32) -> (i32, i32) {
    %c0_i32 = arith.constant 0 : i32
    %c0_i32_0 = arith.constant 0 : i32
    %c0_i32_1 = arith.constant 0 : i32
    return %c0_i32, %c0_i32_0 : i32, i32
  }
  func.func @transform_9(%arg0: i32) -> (i32, i32) {
    %c0_i32 = arith.constant 0 : i32
    %c0_i32_0 = arith.constant 0 : i32
    return %arg0, %c0_i32 : i32, i32
  }
}

</mosaic_0001>

<llo_original>
// kernel: _forward_impl.1
$region0: #{_forward_impl.1}
  #allocation0 [shape = 'u32[]', space=smem, size = 0x4, offset = 0x4, fixed_abs, tag = 'smem constant byte address 0x4 - core index']
  #allocation1 [shape = 'u32[144,128]{1,0:T(1,128)}', space=vmem, size = 0x12000, scoped, tag = 'internal scratch']
  %s0 = inlined_call_operand.vmem [shape: f32[256,64], index: 0, kind: input, shape index: {}]
  %s1 = inlined_call_operand.vmem [shape: bf16[64,128], index: 1, kind: input, shape index: {}]
  %s2 = inlined_call_operand.vmem [shape: f32[1,128], index: 2, kind: input, shape index: {}]
  %s3 = inlined_call_operand.vmem [shape: bf16[128,128], index: 3, kind: input, shape index: {}]
  %s4 = inlined_call_operand.vmem [shape: f32[1,128], index: 4, kind: input, shape index: {}]
  %s5 = inlined_call_operand.vmem [shape: bf16[128,128], index: 5, kind: input, shape index: {}]
  %s6 = inlined_call_operand.vmem [shape: f32[1,128], index: 6, kind: input, shape index: {}]
  %s7 = inlined_call_operand.vmem [shape: bf16[128,128], index: 7, kind: input, shape index: {}]
  %s8 = inlined_call_operand.vmem [shape: f32[1,128], index: 8, kind: input, shape index: {}]
  %s9 = inlined_call_operand.vmem [shape: f32[256,128], index: 9, kind: output, shape index: {}]
  %s10 = sld [smem:[#allocation0]]
  $region69: #{_forward_impl.1} parent=0
    _
  %s12 = ssub.s32 1, %s10
  %s13 = scalar_select 0, %s12, %s10
  loop: start=0, step=1, limit=4
  $region2: #{_forward_impl.1} parent=0 // loop_pre_header
    _
  $region3: #{_forward_impl.1} parent=0 // loop_header
    %s15 = sphi 0, %s19
    %p16 = scmp.ge.s32.totalorder %s15, 4
    %s25 = sphi 0, %s27
    %s28 = sphi 0, %s25
    %s29 = sphi 0, %s28
    %s45 = sphi 0, %s29
    %s49 = sphi 0, %s49
    %s51 = sphi 0, %s49
    %s52 = sphi 0, %s51
    %s66 = sphi 0, %s52
    %s70 = sphi 0, %s70
    %s72 = sphi 0, %s70
    %s73 = sphi 0, %s72
    %s87 = sphi 0, %s73
    %s91 = sphi 0, %s91
    %s93 = sphi 0, %s91
    %s94 = sphi 0, %s93
    %s108 = sphi 0, %s94
    %s112 = sphi 0, %s112
    %s114 = sphi 0, %s112
    %s115 = sphi 0, %s114
    %s129 = sphi 0, %s115
    %s133 = sphi 0, %s133
    %s135 = sphi 0, %s133
    %s136 = sphi 0, %s135
    %s150 = sphi 0, %s136
    %s154 = sphi 0, %s154
    %s156 = sphi 0, %s154
    %s157 = sphi 0, %s156
    %s171 = sphi 0, %s157
    %s175 = sphi 0, %s175
    %s177 = sphi 0, %s175
    %s178 = sphi 0, %s177
    %s192 = sphi 0, %s178
    %s196 = sphi 0, %s196
    %s198 = sphi 0, %s196
    %s199 = sphi 0, %s198
    %s213 = sphi 0, %s199
    %s219 = sphi 0, %s221
    %s222 = sphi 0, %s219
    %s223 = sphi 0, %s222
    %s239 = sphi 0, %s223
  $region4: #{_forward_impl.1} parent=0 // loop_header_branch
    %18 = sbr.rel (%p16) target = $region8
  $region5: #{_forward_impl.1} parent=0 // loop_body
    %s20 = ssub.s32 %s15, 1
    %s21 = ssub.s32 %s15, 2
    %s22 = sadd.s32 %s15, 1
    %s23 = ssub.s32 %s15, %s22
    %p24 = scmp.eq.s32.totalorder %s23, 0
    %s26 = sadd.s32 %s25, 1
    %s27 = scalar_select %p24, %s25, %s26
    %p30 = pneg %p24
    %p31 = scmp.eq.s32.totalorder %s15, 1
    %p32 = por %p30, %p31
    %p33 = scmp.ne.s32.totalorder %s25, %s28
    %p34 = scmp.eq.s32.totalorder %s15, 0
    %p35 = por %p33, %p34
    %p36 = scmp.ne.s32.totalorder %s25, %s28
    %p37 = scmp.eq.s32.totalorder %s20, 1
    %p38 = por %p36, %p37
    %p39 = scmp.ne.s32.totalorder %s28, %s29
    %p40 = scmp.eq.s32.totalorder %s20, 0
    %p41 = por %p39, %p40
    %p42 = scmp.ne.s32.totalorder %s28, %s29
    %p43 = scmp.eq.s32.totalorder %s21, 1
    %p44 = por %p42, %p43
    %p46 = scmp.ne.s32.totalorder %s29, %s45
    %p47 = scmp.eq.s32.totalorder %s21, 0
    %p48 = por %p46, %p47
    %s50 = sadd.s32 %s49, 1
    %p53 = scmp.eq.s32.totalorder %s15, 1
    %p54 = scmp.ne.s32.totalorder %s49, %s51
    %p55 = scmp.eq.s32.totalorder %s15, 0
    %p56 = por %p54, %p55
    %p57 = scmp.ne.s32.totalorder %s49, %s51
    %p58 = scmp.eq.s32.totalorder %s20, 1
    %p59 = por %p57, %p58
    %p60 = scmp.ne.s32.totalorder %s51, %s52
    %p61 = scmp.eq.s32.totalorder %s20, 0
    %p62 = por %p60, %p61
    %p63 = scmp.ne.s32.totalorder %s51, %s52
    %p64 = scmp.eq.s32.totalorder %s21, 1
    %p65 = por %p63, %p64
    %p67 = scmp.ne.s32.totalorder %s52, %s66
    %p68 = scmp.eq.s32.totalorder %s21, 0
    %p69 = por %p67, %p68
    %s71 = sadd.s32 %s70, 1
    %p74 = scmp.eq.s32.totalorder %s15, 1
    %p75 = scmp.ne.s32.totalorder %s70, %s72
    %p76 = scmp.eq.s32.totalorder %s15, 0
    %p77 = por %p75, %p76
    %p78 = scmp.ne.s32.totalorder %s70, %s72
    %p79 = scmp.eq.s32.totalorder %s20, 1
    %p80 = por %p78, %p79
    %p81 = scmp.ne.s32.totalorder %s72, %s73
    %p82 = scmp.eq.s32.totalorder %s20, 0
    %p83 = por %p81, %p82
    %p84 = scmp.ne.s32.totalorder %s72, %s73
    %p85 = scmp.eq.s32.totalorder %s21, 1
    %p86 = por %p84, %p85
    %p88 = scmp.ne.s32.totalorder %s73, %s87
    %p89 = scmp.eq.s32.totalorder %s21, 0
    %p90 = por %p88, %p89
    %s92 = sadd.s32 %s91, 1
    %p95 = scmp.eq.s32.totalorder %s15, 1
    %p96 = scmp.ne.s32.totalorder %s91, %s93
    %p97 = scmp.eq.s32.totalorder %s15, 0
    %p98 = por %p96, %p97
    %p99 = scmp.ne.s32.totalorder %s91, %s93
    %p100 = scmp.eq.s32.totalorder %s20, 1
    %p101 = por %p99, %p100
    %p102 = scmp.ne.s32.totalorder %s93, %s94
    %p103 = scmp.eq.s32.totalorder %s20, 0
    %p104 = por %p102, %p103
    %p105 = scmp.ne.s32.totalorder %s93, %s94
    %p106 = scmp.eq.s32.totalorder %s21, 1
    %p107 = por %p105, %p106
    %p109 = scmp.ne.s32.totalorder %s94, %s108
    %p110 = scmp.eq.s32.totalorder %s21, 0
    %p111 = por %p109, %p110
    %s113 = sadd.s32 %s112, 1
    %p116 = scmp.eq.s32.totalorder %s15, 1
    %p117 = scmp.ne.s32.totalorder %s112, %s114
    %p118 = scmp.eq.s32.totalorder %s15, 0
    %p119 = por %p117, %p118
    %p120 = scmp.ne.s32.totalorder %s112, %s114
    %p121 = scmp.eq.s32.totalorder %s20, 1
    %p122 = por %p120, %p121
    %p123 = scmp.ne.s32.totalorder %s114, %s115
    %p124 = scmp.eq.s32.totalorder %s20, 0
    %p125 = por %p123, %p124
    %p126 = scmp.ne.s32.totalorder %s114, %s115
    %p127 = scmp.eq.s32.totalorder %s21, 1
    %p128 = por %p126, %p127
    %p130 = scmp.ne.s32.totalorder %s115, %s129
    %p131 = scmp.eq.s32.totalorder %s21, 0
    %p132 = por %p130, %p131
    %s134 = sadd.s32 %s133, 1
    %p137 = scmp.eq.s32.totalorder %s15, 1
    %p138 = scmp.ne.s32.totalorder %s133, %s135
    %p139 = scmp.eq.s32.totalorder %s15, 0
    %p140 = por %p138, %p139
    %p141 = scmp.ne.s32.totalorder %s133, %s135
    %p142 = scmp.eq.s32.totalorder %s20, 1
    %p143 = por %p141, %p142
    %p144 = scmp.ne.s32.totalorder %s135, %s136
    %p145 = scmp.eq.s32.totalorder %s20, 0
    %p146 = por %p144, %p145
    %p147 = scmp.ne.s32.totalorder %s135, %s136
    %p148 = scmp.eq.s32.totalorder %s21, 1
    %p149 = por %p147, %p148
    %p151 = scmp.ne.s32.totalorder %s136, %s150
    %p152 = scmp.eq.s32.totalorder %s21, 0
    %p153 = por %p151, %p152
    %s155 = sadd.s32 %s154, 1
    %p158 = scmp.eq.s32.totalorder %s15, 1
    %p159 = scmp.ne.s32.totalorder %s154, %s156
    %p160 = scmp.eq.s32.totalorder %s15, 0
    %p161 = por %p159, %p160
    %p162 = scmp.ne.s32.totalorder %s154, %s156
    %p163 = scmp.eq.s32.totalorder %s20, 1
    %p164 = por %p162, %p163
    %p165 = scmp.ne.s32.totalorder %s156, %s157
    %p166 = scmp.eq.s32.totalorder %s20, 0
    %p167 = por %p165, %p166
    %p168 = scmp.ne.s32.totalorder %s156, %s157
    %p169 = scmp.eq.s32.totalorder %s21, 1
    %p170 = por %p168, %p169
    %p172 = scmp.ne.s32.totalorder %s157, %s171
    %p173 = scmp.eq.s32.totalorder %s21, 0
    %p174 = por %p172, %p173
    %s176 = sadd.s32 %s175, 1
    %p179 = scmp.eq.s32.totalorder %s15, 1
    %p180 = scmp.ne.s32.totalorder %s175, %s177
    %p181 = scmp.eq.s32.totalorder %s15, 0
    %p182 = por %p180, %p181
    %p183 = scmp.ne.s32.totalorder %s175, %s177
    %p184 = scmp.eq.s32.totalorder %s20, 1
    %p185 = por %p183, %p184
    %p186 = scmp.ne.s32.totalorder %s177, %s178
    %p187 = scmp.eq.s32.totalorder %s20, 0
    %p188 = por %p186, %p187
    %p189 = scmp.ne.s32.totalorder %s177, %s178
    %p190 = scmp.eq.s32.totalorder %s21, 1
    %p191 = por %p189, %p190
    %p193 = scmp.ne.s32.totalorder %s178, %s192
    %p194 = scmp.eq.s32.totalorder %s21, 0
    %p195 = por %p193, %p194
    %s197 = sadd.s32 %s196, 1
    %p200 = scmp.eq.s32.totalorder %s15, 1
    %p201 = scmp.ne.s32.totalorder %s196, %s198
    %p202 = scmp.eq.s32.totalorder %s15, 0
    %p203 = por %p201, %p202
    %p204 = scmp.ne.s32.totalorder %s196, %s198
    %p205 = scmp.eq.s32.totalorder %s20, 1
    %p206 = por %p204, %p205
    %p207 = scmp.ne.s32.totalorder %s198, %s199
    %p208 = scmp.eq.s32.totalorder %s20, 0
    %p209 = por %p207, %p208
    %p210 = scmp.ne.s32.totalorder %s198, %s199
    %p211 = scmp.eq.s32.totalorder %s21, 1
    %p212 = por %p210, %p211
    %p214 = scmp.ne.s32.totalorder %s199, %s213
    %p215 = scmp.eq.s32.totalorder %s21, 0
    %p216 = por %p214, %p215
    %s217 = ssub.s32 %s15, %s22
    %p218 = scmp.eq.s32.totalorder %s217, 0
    %s220 = sadd.s32 %s219, 1
    %s221 = scalar_select %p218, %s219, %s220
    %p224 = pneg %p218
    %p225 = scmp.eq.s32.totalorder %s15, 1
    %p226 = por %p224, %p225
    %p227 = scmp.ne.s32.totalorder %s219, %s222
    %p228 = scmp.eq.s32.totalorder %s15, 0
    %p229 = por %p227, %p228
    %p230 = scmp.ne.s32.totalorder %s219, %s222
    %p231 = scmp.eq.s32.totalorder %s20, 1
    %p232 = por %p230, %p231
    %p233 = scmp.ne.s32.totalorder %s222, %s223
    %p234 = scmp.eq.s32.totalorder %s20, 0
    %p235 = por %p233, %p234
    %p236 = scmp.ne.s32.totalorder %s222, %s223
    %p237 = scmp.eq.s32.totalorder %s21, 1
    %p238 = por %p236, %p237
    %p240 = scmp.ne.s32.totalorder %s223, %s239
    %p241 = scmp.eq.s32.totalorder %s21, 0
    %p242 = por %p240, %p241
    %p243 = scmp.le.s32.totalorder 1, %s15
    %p244 = scmp.lt.s32.totalorder %s15, 3
    %p245 = pnand %p243, %p244
    %p246 = pneg %p245
    // Predicated region
    $region9: #{_forward_impl.1} parent=5 // pred_check
      _
    $region10: #{_forward_impl.1} parent=5 // pred_check_branch
      %248 = sbr.rel (%p245) target = $region12
    $region11: #{_forward_impl.1} parent=5 // pred_region
      %s249 = ssub.s32 %s15, 1
      // Predicated region
      $region13: #{_forward_impl.1} parent=11 // pred_check
        %p250 = pneg %p62
      $region14: #{_forward_impl.1} parent=11 // pred_check_branch
        %252 = sbr.rel (%p250) target = $region16
      $region15: #{_forward_impl.1} parent=11 // pred_region
        _
      $region16: #{_forward_impl.1} parent=11 // pred_fallthru
        _
      // Predicated region
      $region17: #{_forward_impl.1} parent=11 // pred_check
        %p253 = pneg %p83
      $region18: #{_forward_impl.1} parent=11 // pred_check_branch
        %255 = sbr.rel (%p253) target = $region20
      $region19: #{_forward_impl.1} parent=11 // pred_region
        _
      $region20: #{_forward_impl.1} parent=11 // pred_fallthru
        _
      // Predicated region
      $region21: #{_forward_impl.1} parent=11 // pred_check
        %p256 = pneg %p104
      $region22: #{_forward_impl.1} parent=11 // pred_check_branch
        %258 = sbr.rel (%p256) target = $region24
      $region23: #{_forward_impl.1} parent=11 // pred_region
        _
      $region24: #{_forward_impl.1} parent=11 // pred_fallthru
        _
      // Predicated region
      $region25: #{_forward_impl.1} parent=11 // pred_check
        %p259 = pneg %p125
      $region26: #{_forward_impl.1} parent=11 // pred_check_branch
        %261 = sbr.rel (%p259) target = $region28
      $region27: #{_forward_impl.1} parent=11 // pred_region
        _
      $region28: #{_forward_impl.1} parent=11 // pred_fallthru
        _
      // Predicated region
      $region29: #{_forward_impl.1} parent=11 // pred_check
        %p262 = pneg %p146
      $region30: #{_forward_impl.1} parent=11 // pred_check_branch
        %264 = sbr.rel (%p262) target = $region32
      $region31: #{_forward_impl.1} parent=11 // pred_region
        _
      $region32: #{_forward_impl.1} parent=11 // pred_fallthru
        _
      // Predicated region
      $region33: #{_forward_impl.1} parent=11 // pred_check
        %p265 = pneg %p167
      $region34: #{_forward_impl.1} parent=11 // pred_check_branch
        %267 = sbr.rel (%p265) target = $region36
      $region35: #{_forward_impl.1} parent=11 // pred_region
        _
      $region36: #{_forward_impl.1} parent=11 // pred_fallthru
        _
      // Predicated region
      $region37: #{_forward_impl.1} parent=11 // pred_check
        %p268 = pneg %p188
      $region38: #{_forward_impl.1} parent=11 // pred_check_branch
        %270 = sbr.rel (%p268) target = $region40
      $region39: #{_forward_impl.1} parent=11 // pred_region
        _
      $region40: #{_forward_impl.1} parent=11 // pred_fallthru
        _
      // Predicated region
      $region41: #{_forward_impl.1} parent=11 // pred_check
        %p271 = pneg %p209
      $region42: #{_forward_impl.1} parent=11 // pred_check_branch
        %273 = sbr.rel (%p271) target = $region44
      $region43: #{_forward_impl.1} parent=11 // pred_region
        _
      $region44: #{_forward_impl.1} parent=11 // pred_fallthru
        _
    $region12: #{_forward_impl.1} parent=5 // pred_fallthru
      _
    %p274 = scmp.lt.s32.totalorder %s15, 2
    // Predicated region
    $region45: #{_forward_impl.1} parent=5 // pred_check
      %p275 = pneg %p274
    $region46: #{_forward_impl.1} parent=5 // pred_check_branch
      %277 = sbr.rel (%p275) target = $region48
    $region47: #{_forward_impl.1} parent=5 // pred_region
      // Predicated region
      $region49: #{_forward_impl.1} parent=47 // pred_check
        %p278 = pneg %p35
      $region50: #{_forward_impl.1} parent=47 // pred_check_branch
        %280 = sbr.rel (%p278) target = $region52
      $region51: #{_forward_impl.1} parent=47 // pred_region
        %s281 = smul.u32 16, %s15
        %p282 = scmp.lt.s32.totalorder %s281, 31
        %s283 = scalar_select %p282, %s281, 31
        %s284 = smul.addr %s283, 8
        %s285 = scalar_lea.vmem %s0, %s284
        %s286 = smul.u32 16, %s15
      $region52: #{_forward_impl.1} parent=47 // pred_fallthru
        _
    $region48: #{_forward_impl.1} parent=5 // pred_fallthru
      _
    %p287 = scmp.le.s32.totalorder 1, %s15
    %p288 = scmp.lt.s32.totalorder %s15, 3
    %p289 = pnand %p287, %p288
    %p290 = pneg %p289
    // Predicated region
    $region53: #{_forward_impl.1} parent=5 // pred_check
      _
    $region54: #{_forward_impl.1} parent=5 // pred_check_branch
      %292 = sbr.rel (%p289) target = $region56
    $region55: #{_forward_impl.1} parent=5 // pred_region
      %s293 = ssub.s32 %s15, 1
      %s294 = smul.u32 16, %s20
      %p295 = scmp.lt.s32.totalorder %s294, 31
      %s296 = scalar_select %p295, %s294, 31
      %s297 = smul.addr %s296, 8
      %s298 = scalar_lea.vmem %s0, %s297
      %p299 = pneg %p41
      %p300 = pneg %p38
      %p301 = pneg %p62
      %p302 = pneg %p59
      %p303 = pneg %p83
      %p304 = pneg %p80
      %p305 = pneg %p104
      %p306 = pneg %p101
      %p307 = pneg %p125
      %p308 = pneg %p122
      %p309 = pneg %p146
      %p310 = pneg %p143
      %p311 = pneg %p167
      %p312 = pneg %p164
      %p313 = pneg %p188
      %p314 = pneg %p185
      %p315 = pneg %p209
      %p316 = pneg %p206
      %p317 = pneg %p235
      %p318 = pneg %p232
      %s319 = smul.u32 16, %s20
      %p320 = scmp.lt.s32.totalorder %s319, 31
      %s321 = scalar_select %p320, %s319, 31
      %s322 = smul.addr %s321, 8
      %s323 = scalar_lea.vmem %s9, %s322
      %s324 = smul.u32 16, %s20
      %p325 = scmp.lt.s32.totalorder %s324, 31
      %s326 = scalar_select %p325, %s324, 31
      %s327 = smul.addr %s326, 8
      %s328 = scalar_lea.vmem %s0, %s327
      %s329 = smul.u32 16, %s20
      %s330 = smul.u32 16, %s20
      %p331 = scmp.lt.s32.totalorder %s330, 31
      %s332 = scalar_select %p331, %s330, 31
      %s333 = smul.addr %s332, 8
      %s334 = scalar_lea.vmem %s9, %s333
      %s335 = smul.u32 16, %s20
      %v337 = vld [vmem:[%s328] sm:$0xff]
      %v338 = vld [vmem:[%s328 + $0x8] sm:$0xff]
      %v339 = vld [vmem:[%s328 + $0x10] sm:$0xff]
      %v340 = vld [vmem:[%s328 + $0x18] sm:$0xff]
      %v341 = vld [vmem:[%s328 + $0x20] sm:$0xff]
      %v342 = vld [vmem:[%s328 + $0x28] sm:$0xff]
      %v343 = vld [vmem:[%s328 + $0x30] sm:$0xff]
      %v344 = vld [vmem:[%s328 + $0x38] sm:$0xff]
      %v345 = vld [vmem:[%s328 + $0x40] sm:$0xff]
      %v346 = vld [vmem:[%s328 + $0x48] sm:$0xff]
      %v347 = vld [vmem:[%s328 + $0x50] sm:$0xff]
      %v348 = vld [vmem:[%s328 + $0x58] sm:$0xff]
      %v349 = vld [vmem:[%s328 + $0x60] sm:$0xff]
      %v350 = vld [vmem:[%s328 + $0x68] sm:$0xff]
      %v351 = vld [vmem:[%s328 + $0x70] sm:$0xff]
      %v352 = vld [vmem:[%s328 + $0x78] sm:$0xff]
      %v353 = vpack.c.bf16 %v338, %v337
      %v354 = vpack.c.bf16 %v340, %v339
      %v355 = vpack.c.bf16 %v342, %v341
      %v356 = vpack.c.bf16 %v344, %v343
      %v357 = vpack.c.bf16 %v346, %v345
      %v358 = vpack.c.bf16 %v348, %v347
      %v359 = vpack.c.bf16 %v350, %v349
      %v360 = vpack.c.bf16 %v352, %v351
      %v361 = vld [vmem:[%s1] sm:$0xf]
      %v362 = vld [vmem:[%s1 + $0x4] sm:$0xf]
      %v363 = vld [vmem:[%s1 + $0x8] sm:$0xf]
      %v364 = vld [vmem:[%s1 + $0xc] sm:$0xf]
      %v365 = vld [vmem:[%s1 + $0x10] sm:$0xf]
      %v366 = vld [vmem:[%s1 + $0x14] sm:$0xf]
      %v367 = vld [vmem:[%s1 + $0x18] sm:$0xf]
      %v368 = vld [vmem:[%s1 + $0x1c] sm:$0xf]
      %v369 = vld [vmem:[%s2] sm:$0x1]
      %v371 = vlaneseq
      %v372 = vshrl.u32 %v371, 7
      %v373 = vsub.s32 0, %v372
      %v374 = vrot.slane %v369, %v373
      %v384 = vunpack.c.l.b16 %v361
      %v385 = vunpack.c.l.b16 %v362
      %v386 = vunpack.c.l.b16 %v363
      %v387 = vunpack.c.l.b16 %v364
      %v388 = vunpack.c.l.b16 %v365
      %v389 = vunpack.c.l.b16 %v366
      %v390 = vunpack.c.l.b16 %v367
      %v391 = vunpack.c.l.b16 %v368
      %v392 = vpack.c.b16 %v385, %v384
      %v393 = vpack.c.b16 %v387, %v386
      %v394 = vpack.c.b16 %v389, %v388
      %v395 = vpack.c.b16 %v391, %v390
      %vm400 = vcmask 523264
      %v402 = vsel %vm400, %v353, 0
      %v405 = vsel %vm400, %v354, 0
      %v408 = vsel %vm400, %v355, 0
      %v411 = vsel %vm400, %v356, 0
      %v414 = vsel %vm400, %v357, 0
      %v417 = vsel %vm400, %v358, 0
      %v420 = vsel %vm400, %v359, 0
      %v423 = vsel %vm400, %v360, 0
      %425 = vmatprep.subr.bf16.mxu0 0
      %426 = vmatpush1.bf16.msra.mxu0 %v392
      %427 = vmatprep.subr.bf16.mxu0 0
      %428 = vmatpush1.bf16.msra.mxu0 %v393
      %429 = vmatprep.subr.bf16.mxu0 0
      %430 = vmatpush1.bf16.msra.mxu0 %v394
      %431 = vmatprep.subr.bf16.mxu0 0
      %432 = vmatpush1.bf16.msra.mxu0 %v395
      %433 = vmatprep.subr.bf16.mxu0 0
      %434 = vmatpush1.bf16.msra.mxu0 0
      %435 = vmatprep.subr.bf16.mxu0 0
      %436 = vmatpush1.bf16.msra.mxu0 0
      %437 = vmatprep.subr.bf16.mxu0 0
      %438 = vmatpush1.bf16.msra.mxu0 0
      %439 = vmatprep.subr.bf16.mxu0 0
      %440 = vmatpush1.bf16.msra.mxu0 0
      %441 = vmatprep.subr.bf16.mxu0 0
      %442 = vmatpush1.bf16.msra.mxu0 0
      %443 = vmatprep.subr.bf16.mxu0 0
      %444 = vmatpush1.bf16.msra.mxu0 0
      %445 = vmatprep.subr.bf16.mxu0 0
      %446 = vmatpush1.bf16.msra.mxu0 0
      %447 = vmatprep.subr.bf16.mxu0 0
      %448 = vmatpush1.bf16.msra.mxu0 0
      %449 = vmatprep.subr.bf16.mxu0 0
      %450 = vmatpush1.bf16.msra.mxu0 0
      %451 = vmatprep.subr.bf16.mxu0 0
      %452 = vmatpush1.bf16.msra.mxu0 0
      %453 = vmatprep.subr.bf16.mxu0 0
      %454 = vmatpush1.bf16.msra.mxu0 0
      %455 = vmatprep.subr.bf16.mxu0 0
      %456 = vmatpush1.bf16.msra.mxu0 0
      %457 = vmatprep.mubr.bf16.mxu0 0
      %458 = vmatmul.mubr.bf16.gmra.mrb[0].mxu0 %v402
      %v459 = vpop.f32.mrb[0].mxu0
      %v460 = vadd.f32 %v374, %v459
      %v461 = vpop.f32.mrb[0].mxu0
      %v462 = vpop.f32.mrb[0].mxu0
      %v463 = vadd.f32 %v374, %v462
      %v464 = vpop.f32.mrb[0].mxu0
      %465 = vmatprep.mubr.bf16.mxu0 0
      %466 = vmatmul.mubr.bf16.gmra.mrb[0].mxu0 %v405
      %v467 = vpop.f32.mrb[0].mxu0
      %v468 = vadd.f32 %v374, %v467
      %v469 = vpop.f32.mrb[0].mxu0
      %v470 = vpop.f32.mrb[0].mxu0
      %v471 = vadd.f32 %v374, %v470
      %v472 = vpop.f32.mrb[0].mxu0
      %473 = vmatprep.mubr.bf16.mxu0 0
      %474 = vmatmul.mubr.bf16.gmra.mrb[0].mxu0 %v408
      %v475 = vpop.f32.mrb[0].mxu0
      %v476 = vadd.f32 %v374, %v475
      %v477 = vpop.f32.mrb[0].mxu0
      %v478 = vpop.f32.mrb[0].mxu0
      %v479 = vadd.f32 %v374, %v478
      %v480 = vpop.f32.mrb[0].mxu0
      %481 = vmatprep.mubr.bf16.mxu0 0
      %482 = vmatmul.mubr.bf16.gmra.mrb[0].mxu0 %v411
      %v483 = vpop.f32.mrb[0].mxu0
      %v484 = vadd.f32 %v374, %v483
      %v485 = vpop.f32.mrb[0].mxu0
      %v486 = vpop.f32.mrb[0].mxu0
      %v487 = vadd.f32 %v374, %v486
      %v488 = vpop.f32.mrb[0].mxu0
      %489 = vmatprep.mubr.bf16.mxu0 0
      %490 = vmatmul.mubr.bf16.gmra.mrb[0].mxu0 %v414
      %v491 = vpop.f32.mrb[0].mxu0
      %v492 = vadd.f32 %v374, %v491
      %v493 = vpop.f32.mrb[0].mxu0
      %v494 = vpop.f32.mrb[0].mxu0
      %v495 = vadd.f32 %v374, %v494
      %v496 = vpop.f32.mrb[0].mxu0
      %497 = vmatprep.mubr.bf16.mxu0 0
      %498 = vmatmul.mubr.bf16.gmra.mrb[0].mxu0 %v417
      %v499 = vpop.f32.mrb[0].mxu0
      %v500 = vadd.f32 %v374, %v499
      %v501 = vpop.f32.mrb[0].mxu0
      %v502 = vpop.f32.mrb[0].mxu0
      %v503 = vadd.f32 %v374, %v502
      %v504 = vpop.f32.mrb[0].mxu0
      %505 = vmatprep.mubr.bf16.mxu0 0
      %506 = vmatmul.mubr.bf16.gmra.mrb[0].mxu0 %v420
      %v507 = vpop.f32.mrb[0].mxu0
      %v508 = vadd.f32 %v374, %v507
      %v509 = vpop.f32.mrb[0].mxu0
      %v510 = vpop.f32.mrb[0].mxu0
      %v511 = vadd.f32 %v374, %v510
      %v512 = vpop.f32.mrb[0].mxu0
      %513 = vmatprep.mubr.bf16.mxu0 0
      %514 = vmatmul.mubr.bf16.gmra.mrb[0].mxu0 %v423
      %v515 = vpop.f32.mrb[0].mxu0
      %v516 = vadd.f32 %v374, %v515
      %v517 = vpop.f32.mrb[0].mxu0
      %v518 = vpop.f32.mrb[0].mxu0
      %v519 = vadd.f32 %v374, %v518
      %v520 = vpop.f32.mrb[0].mxu0
      %521 = vdwg.mxu0
      %v522 = vmax.f32 %v460, 0.0
      %v523 = vmax.f32 %v463, 0.0
      %v524 = vmax.f32 %v468, 0.0
      %v525 = vmax.f32 %v471, 0.0
      %v526 = vmax.f32 %v476, 0.0
      %v527 = vmax.f32 %v479, 0.0
      %v528 = vmax.f32 %v484, 0.0
      %v529 = vmax.f32 %v487, 0.0
      %v530 = vmax.f32 %v492, 0.0
      %v531 = vmax.f32 %v495, 0.0
      %v532 = vmax.f32 %v500, 0.0
      %v533 = vmax.f32 %v503, 0.0
      %v534 = vmax.f32 %v508, 0.0
      %v535 = vmax.f32 %v511, 0.0
      %v536 = vmax.f32 %v516, 0.0
      %v537 = vmax.f32 %v519, 0.0
      %v538 = vpack.c.bf16 %v523, %v522
      %v539 = vpack.c.bf16 %v525, %v524
      %v540 = vpack.c.bf16 %v527, %v526
      %v541 = vpack.c.bf16 %v529, %v528
      %v542 = vpack.c.bf16 %v531, %v530
      %v543 = vpack.c.bf16 %v533, %v532
      %v544 = vpack.c.bf16 %v535, %v534
      %v545 = vpack.c.bf16 %v537, %v536
      %v546 = vld [vmem:[%s3] sm:$0xf]
      %v547 = vld [vmem:[%s3 + $0x4] sm:$0xf]
      %v548 = vld [vmem:[%s3 + $0x8] sm:$0xf]
      %v549 = vld [vmem:[%s3 + $0xc] sm:$0xf]
      %v550 = vld [vmem:[%s3 + $0x10] sm:$0xf]
      %v551 = vld [vmem:[%s3 + $0x14] sm:$0xf]
      %v552 = vld [vmem:[%s3 + $0x18] sm:$0xf]
      %v553 = vld [vmem:[%s3 + $0x1c] sm:$0xf]
      %v554 = vld [vmem:[%s3 + $0x20] sm:$0xf]
      %v555 = vld [vmem:[%s3 + $0x24] sm:$0xf]
      %v556 = vld [vmem:[%s3 + $0x28] sm:$0xf]
      %v557 = vld [vmem:[%s3 + $0x2c] sm:$0xf]
      %v558 = vld [vmem:[%s3 + $0x30] sm:$0xf]
      %v559 = vld [vmem:[%s3 + $0x34] sm:$0xf]
      %v560 = vld [vmem:[%s3 + $0x38] sm:$0xf]
      %v561 = vld [vmem:[%s3 + $0x3c] sm:$0xf]
      %v562 = vld [vmem:[%s4] sm:$0x1]
      %v564 = vlaneseq
      %v565 = vshrl.u32 %v564, 7
      %v566 = vsub.s32 0, %v565
      %v567 = vrot.slane %v562, %v566
      %v585 = vunpack.c.l.b16 %v546
      %v586 = vunpack.c.l.b16 %v547
      %v587 = vunpack.c.l.b16 %v548
      %v588 = vunpack.c.l.b16 %v549
      %v589 = vunpack.c.l.b16 %v550
      %v590 = vunpack.c.l.b16 %v551
      %v591 = vunpack.c.l.b16 %v552
      %v592 = vunpack.c.l.b16 %v553
      %v593 = vunpack.c.l.b16 %v554
      %v594 = vunpack.c.l.b16 %v555
      %v595 = vunpack.c.l.b16 %v556
      %v596 = vunpack.c.l.b16 %v557
      %v597 = vunpack.c.l.b16 %v558
      %v598 = vunpack.c.l.b16 %v559
      %v599 = vunpack.c.l.b16 %v560
      %v600 = vunpack.c.l.b16 %v561
      %v601 = vpack.c.b16 %v586, %v585
      %v602 = vpack.c.b16 %v588, %v587
      %v603 = vpack.c.b16 %v590, %v589
      %v604 = vpack.c.b16 %v592, %v591
      %v605 = vpack.c.b16 %v594, %v593
      %v606 = vpack.c.b16 %v596, %v595
      %v607 = vpack.c.b16 %v598, %v597
      %v608 = vpack.c.b16 %v600, %v599
      %617 = vmatprep.subr.bf16.mxu0 0
      %618 = vmatpush1.bf16.msra.mxu0 %v601
      %619 = vmatprep.subr.bf16.mxu0 0
      %620 = vmatpush1.bf16.msra.mxu0 %v602
      %621 = vmatprep.subr.bf16.mxu0 0
      %622 = vmatpush1.bf16.msra.mxu0 %v603
      %623 = vmatprep.subr.bf16.mxu0 0
      %624 = vmatpush1.bf16.msra.mxu0 %v604
      %625 = vmatprep.subr.bf16.mxu0 0
      %626 = vmatpush1.bf16.msra.mxu0 %v605
      %627 = vmatprep.subr.bf16.mxu0 0
      %628 = vmatpush1.bf16.msra.mxu0 %v606
      %629 = vmatprep.subr.bf16.mxu0 0
      %630 = vmatpush1.bf16.msra.mxu0 %v607
      %631 = vmatprep.subr.bf16.mxu0 0
      %632 = vmatpush1.bf16.msra.mxu0 %v608
      %633 = vmatprep.subr.bf16.mxu0 0
      %634 = vmatpush1.bf16.msra.mxu0 0
      %635 = vmatprep.subr.bf16.mxu0 0
      %636 = vmatpush1.bf16.msra.mxu0 0
      %637 = vmatprep.subr.bf16.mxu0 0
      %638 = vmatpush1.bf16.msra.mxu0 0
      %639 = vmatprep.subr.bf16.mxu0 0
      %640 = vmatpush1.bf16.msra.mxu0 0
      %641 = vmatprep.subr.bf16.mxu0 0
      %642 = vmatpush1.bf16.msra.mxu0 0
      %643 = vmatprep.subr.bf16.mxu0 0
      %644 = vmatpush1.bf16.msra.mxu0 0
      %645 = vmatprep.subr.bf16.mxu0 0
      %646 = vmatpush1.bf16.msra.mxu0 0
      %647 = vmatprep.subr.bf16.mxu0 0
      %648 = vmatpush1.bf16.msra.mxu0 0
      %649 = vmatprep.mubr.bf16.mxu0 0
      %650 = vmatmul.mubr.bf16.gmra.mrb[0].mxu0 %v538
      %v651 = vpop.f32.mrb[0].mxu0
      %v652 = vadd.f32 %v567, %v651
      %v653 = vpop.f32.mrb[0].mxu0
      %v654 = vpop.f32.mrb[0].mxu0
      %v655 = vadd.f32 %v567, %v654
      %v656 = vpop.f32.mrb[0].mxu0
      %657 = vmatprep.mubr.bf16.mxu0 0
      %658 = vmatmul.mubr.bf16.gmra.mrb[0].mxu0 %v539
      %v659 = vpop.f32.mrb[0].mxu0
      %v660 = vadd.f32 %v567, %v659
      %v661 = vpop.f32.mrb[0].mxu0
      %v662 = vpop.f32.mrb[0].mxu0
      %v663 = vadd.f32 %v567, %v662
      %v664 = vpop.f32.mrb[0].mxu0
      %665 = vmatprep.mubr.bf16.mxu0 0
      %666 = vmatmul.mubr.bf16.gmra.mrb[0].mxu0 %v540
      %v667 = vpop.f32.mrb[0].mxu0
      %v668 = vadd.f32 %v567, %v667
      %v669 = vpop.f32.mrb[0].mxu0
      %v670 = vpop.f32.mrb[0].mxu0
      %v671 = vadd.f32 %v567, %v670
      %v672 = vpop.f32.mrb[0].mxu0
      %673 = vmatprep.mubr.bf16.mxu0 0
      %674 = vmatmul.mubr.bf16.gmra.mrb[0].mxu0 %v541
      %v675 = vpop.f32.mrb[0].mxu0
      %v676 = vadd.f32 %v567, %v675
      %v677 = vpop.f32.mrb[0].mxu0
      %v678 = vpop.f32.mrb[0].mxu0
      %v679 = vadd.f32 %v567, %v678
      %v680 = vpop.f32.mrb[0].mxu0
      %681 = vmatprep.mubr.bf16.mxu0 0
      %682 = vmatmul.mubr.bf16.gmra.mrb[0].mxu0 %v542
      %v683 = vpop.f32.mrb[0].mxu0
      %v684 = vadd.f32 %v567, %v683
      %v685 = vpop.f32.mrb[0].mxu0
      %v686 = vpop.f32.mrb[0].mxu0
      %v687 = vadd.f32 %v567, %v686
      %v688 = vpop.f32.mrb[0].mxu0
      %689 = vmatprep.mubr.bf16.mxu0 0
      %690 = vmatmul.mubr.bf16.gmra.mrb[0].mxu0 %v543
      %v691 = vpop.f32.mrb[0].mxu0
      %v692 = vadd.f32 %v567, %v691
      %v693 = vpop.f32.mrb[0].mxu0
      %v694 = vpop.f32.mrb[0].mxu0
      %v695 = vadd.f32 %v567, %v694
      %v696 = vpop.f32.mrb[0].mxu0
      %697 = vmatprep.mubr.bf16.mxu0 0
      %698 = vmatmul.mubr.bf16.gmra.mrb[0].mxu0 %v544
      %v699 = vpop.f32.mrb[0].mxu0
      %v700 = vadd.f32 %v567, %v699
      %v701 = vpop.f32.mrb[0].mxu0
      %v702 = vpop.f32.mrb[0].mxu0
      %v703 = vadd.f32 %v567, %v702
      %v704 = vpop.f32.mrb[0].mxu0
      %705 = vmatprep.mubr.bf16.mxu0 0
      %706 = vmatmul.mubr.bf16.gmra.mrb[0].mxu0 %v545
      %v707 = vpop.f32.mrb[0].mxu0
      %v708 = vadd.f32 %v567, %v707
      %v709 = vpop.f32.mrb[0].mxu0
      %v710 = vpop.f32.mrb[0].mxu0
      %v711 = vadd.f32 %v567, %v710
      %v712 = vpop.f32.mrb[0].mxu0
      %713 = vdwg.mxu0
      %v714 = vmax.f32 %v652, 0.0
      %v715 = vmax.f32 %v655, 0.0
      %v716 = vmax.f32 %v660, 0.0
      %v717 = vmax.f32 %v663, 0.0
      %v718 = vmax.f32 %v668, 0.0
      %v719 = vmax.f32 %v671, 0.0
      %v720 = vmax.f32 %v676, 0.0
      %v721 = vmax.f32 %v679, 0.0
      %v722 = vmax.f32 %v684, 0.0
      %v723 = vmax.f32 %v687, 0.0
      %v724 = vmax.f32 %v692, 0.0
      %v725 = vmax.f32 %v695, 0.0
      %v726 = vmax.f32 %v700, 0.0
      %v727 = vmax.f32 %v703, 0.0
      %v728 = vmax.f32 %v708, 0.0
      %v729 = vmax.f32 %v711, 0.0
      %v730 = vpack.c.bf16 %v715, %v714
      %v731 = vpack.c.bf16 %v717, %v716
      %v732 = vpack.c.bf16 %v719, %v718
      %v733 = vpack.c.bf16 %v721, %v720
      %v734 = vpack.c.bf16 %v723, %v722
      %v735 = vpack.c.bf16 %v725, %v724
      %v736 = vpack.c.bf16 %v727, %v726
      %v737 = vpack.c.bf16 %v729, %v728
      %v738 = vld [vmem:[%s5] sm:$0xf]
      %v739 = vld [vmem:[%s5 + $0x4] sm:$0xf]
      %v740 = vld [vmem:[%s5 + $0x8] sm:$0xf]
      %v741 = vld [vmem:[%s5 + $0xc] sm:$0xf]
      %v742 = vld [vmem:[%s5 + $0x10] sm:$0xf]
      %v743 = vld [vmem:[%s5 + $0x14] sm:$0xf]
      %v744 = vld [vmem:[%s5 + $0x18] sm:$0xf]
      %v745 = vld [vmem:[%s5 + $0x1c] sm:$0xf]
      %v746 = vld [vmem:[%s5 + $0x20] sm:$0xf]
      %v747 = vld [vmem:[%s5 + $0x24] sm:$0xf]
      %v748 = vld [vmem:[%s5 + $0x28] sm:$0xf]
      %v749 = vld [vmem:[%s5 + $0x2c] sm:$0xf]
      %v750 = vld [vmem:[%s5 + $0x30] sm:$0xf]
      %v751 = vld [vmem:[%s5 + $0x34] sm:$0xf]
      %v752 = vld [vmem:[%s5 + $0x38] sm:$0xf]
      %v753 = vld [vmem:[%s5 + $0x3c] sm:$0xf]
      %v754 = vld [vmem:[%s6] sm:$0x1]
      %v756 = vlaneseq
      %v757 = vshrl.u32 %v756, 7
      %v758 = vsub.s32 0, %v757
      %v759 = vrot.slane %v754, %v758
      %v777 = vunpack.c.l.b16 %v738
      %v778 = vunpack.c.l.b16 %v739
      %v779 = vunpack.c.l.b16 %v740
      %v780 = vunpack.c.l.b16 %v741
      %v781 = vunpack.c.l.b16 %v742
      %v782 = vunpack.c.l.b16 %v743
      %v783 = vunpack.c.l.b16 %v744
      %v784 = vunpack.c.l.b16 %v745
      %v785 = vunpack.c.l.b16 %v746
      %v786 = vunpack.c.l.b16 %v747
      %v787 = vunpack.c.l.b16 %v748
      %v788 = vunpack.c.l.b16 %v749
      %v789 = vunpack.c.l.b16 %v750
      %v790 = vunpack.c.l.b16 %v751
      %v791 = vunpack.c.l.b16 %v752
      %v792 = vunpack.c.l.b16 %v753
      %v793 = vpack.c.b16 %v778, %v777
      %v794 = vpack.c.b16 %v780, %v779
      %v795 = vpack.c.b16 %v782, %v781
      %v796 = vpack.c.b16 %v784, %v783
      %v797 = vpack.c.b16 %v786, %v785
      %v798 = vpack.c.b16 %v788, %v787
      %v799 = vpack.c.b16 %v790, %v789
      %v800 = vpack.c.b16 %v792, %v791
      %809 = vmatprep.subr.bf16.mxu0 0
      %810 = vmatpush1.bf16.msra.mxu0 %v793
      %811 = vmatprep.subr.bf16.mxu0 0
      %812 = vmatpush1.bf16.msra.mxu0 %v794
      %813 = vmatprep.subr.bf16.mxu0 0
      %814 = vmatpush1.bf16.msra.mxu0 %v795
      %815 = vmatprep.subr.bf16.mxu0 0
      %816 = vmatpush1.bf16.msra.mxu0 %v796
      %817 = vmatprep.subr.bf16.mxu0 0
      %818 = vmatpush1.bf16.msra.mxu0 %v797
      %819 = vmatprep.subr.bf16.mxu0 0
      %820 = vmatpush1.bf16.msra.mxu0 %v798
      %821 = vmatprep.subr.bf16.mxu0 0
      %822 = vmatpush1.bf16.msra.mxu0 %v799
      %823 = vmatprep.subr.bf16.mxu0 0
      %824 = vmatpush1.bf16.msra.mxu0 %v800
      %825 = vmatprep.subr.bf16.mxu0 0
      %826 = vmatpush1.bf16.msra.mxu0 0
      %827 = vmatprep.subr.bf16.mxu0 0
      %828 = vmatpush1.bf16.msra.mxu0 0
      %829 = vmatprep.subr.bf16.mxu0 0
      %830 = vmatpush1.bf16.msra.mxu0 0
      %831 = vmatprep.subr.bf16.mxu0 0
      %832 = vmatpush1.bf16.msra.mxu0 0
      %833 = vmatprep.subr.bf16.mxu0 0
      %834 = vmatpush1.bf16.msra.mxu0 0
      %835 = vmatprep.subr.bf16.mxu0 0
      %836 = vmatpush1.bf16.msra.mxu0 0
      %837 = vmatprep.subr.bf16.mxu0 0
      %838 = vmatpush1.bf16.msra.mxu0 0
      %839 = vmatprep.subr.bf16.mxu0 0
      %840 = vmatpush1.bf16.msra.mxu0 0
      %841 = vmatprep.mubr.bf16.mxu0 0
      %842 = vmatmul.mubr.bf16.gmra.mrb[0].mxu0 %v730
      %v843 = vpop.f32.mrb[0].mxu0
      %v844 = vadd.f32 %v759, %v843
      %v845 = vpop.f32.mrb[0].mxu0
      %v846 = vpop.f32.mrb[0].mxu0
      %v847 = vadd.f32 %v759, %v846
      %v848 = vpop.f32.mrb[0].mxu0
      %849 = vmatprep.mubr.bf16.mxu0 0
      %850 = vmatmul.mubr.bf16.gmra.mrb[0].mxu0 %v731
      %v851 = vpop.f32.mrb[0].mxu0
      %v852 = vadd.f32 %v759, %v851
      %v853 = vpop.f32.mrb[0].mxu0
      %v854 = vpop.f32.mrb[0].mxu0
      %v855 = vadd.f32 %v759, %v854
      %v856 = vpop.f32.mrb[0].mxu0
      %857 = vmatprep.mubr.bf16.mxu0 0
      %858 = vmatmul.mubr.bf16.gmra.mrb[0].mxu0 %v732
      %v859 = vpop.f32.mrb[0].mxu0
      %v860 = vadd.f32 %v759, %v859
      %v861 = vpop.f32.mrb[0].mxu0
      %v862 = vpop.f32.mrb[0].mxu0
      %v863 = vadd.f32 %v759, %v862
      %v864 = vpop.f32.mrb[0].mxu0
      %865 = vmatprep.mubr.bf16.mxu0 0
      %866 = vmatmul.mubr.bf16.gmra.mrb[0].mxu0 %v733
      %v867 = vpop.f32.mrb[0].mxu0
      %v868 = vadd.f32 %v759, %v867
      %v869 = vpop.f32.mrb[0].mxu0
      %v870 = vpop.f32.mrb[0].mxu0
      %v871 = vadd.f32 %v759, %v870
      %v872 = vpop.f32.mrb[0].mxu0
      %873 = vmatprep.mubr.bf16.mxu0 0
      %874 = vmatmul.mubr.bf16.gmra.mrb[0].mxu0 %v734
      %v875 = vpop.f32.mrb[0].mxu0
      %v876 = vadd.f32 %v759, %v875
      %v877 = vpop.f32.mrb[0].mxu0
      %v878 = vpop.f32.mrb[0].mxu0
      %v879 = vadd.f32 %v759, %v878
      %v880 = vpop.f32.mrb[0].mxu0
      %881 = vmatprep.mubr.bf16.mxu0 0
      %882 = vmatmul.mubr.bf16.gmra.mrb[0].mxu0 %v735
      %v883 = vpop.f32.mrb[0].mxu0
      %v884 = vadd.f32 %v759, %v883
      %v885 = vpop.f32.mrb[0].mxu0
      %v886 = vpop.f32.mrb[0].mxu0
      %v887 = vadd.f32 %v759, %v886
      %v888 = vpop.f32.mrb[0].mxu0
      %889 = vmatprep.mubr.bf16.mxu0 0
      %890 = vmatmul.mubr.bf16.gmra.mrb[0].mxu0 %v736
      %v891 = vpop.f32.mrb[0].mxu0
      %v892 = vadd.f32 %v759, %v891
      %v893 = vpop.f32.mrb[0].mxu0
      %v894 = vpop.f32.mrb[0].mxu0
      %v895 = vadd.f32 %v759, %v894
      %v896 = vpop.f32.mrb[0].mxu0
      %897 = vmatprep.mubr.bf16.mxu0 0
      %898 = vmatmul.mubr.bf16.gmra.mrb[0].mxu0 %v737
      %v899 = vpop.f32.mrb[0].mxu0
      %v900 = vadd.f32 %v759, %v899
      %v901 = vpop.f32.mrb[0].mxu0
      %v902 = vpop.f32.mrb[0].mxu0
      %v903 = vadd.f32 %v759, %v902
      %v904 = vpop.f32.mrb[0].mxu0
      %905 = vdwg.mxu0
      %v906 = vmax.f32 %v844, 0.0
      %v907 = vmax.f32 %v847, 0.0
      %v908 = vmax.f32 %v852, 0.0
      %v909 = vmax.f32 %v855, 0.0
      %v910 = vmax.f32 %v860, 0.0
      %v911 = vmax.f32 %v863, 0.0
      %v912 = vmax.f32 %v868, 0.0
      %v913 = vmax.f32 %v871, 0.0
      %v914 = vmax.f32 %v876, 0.0
      %v915 = vmax.f32 %v879, 0.0
      %v916 = vmax.f32 %v884, 0.0
      %v917 = vmax.f32 %v887, 0.0
      %v918 = vmax.f32 %v892, 0.0
      %v919 = vmax.f32 %v895, 0.0
      %v920 = vmax.f32 %v900, 0.0
      %v921 = vmax.f32 %v903, 0.0
      %v922 = vpack.c.bf16 %v907, %v906
      %v923 = vpack.c.bf16 %v909, %v908
      %v924 = vpack.c.bf16 %v911, %v910
      %v925 = vpack.c.bf16 %v913, %v912
      %v926 = vpack.c.bf16 %v915, %v914
      %v927 = vpack.c.bf16 %v917, %v916
      %v928 = vpack.c.bf16 %v919, %v918
      %v929 = vpack.c.bf16 %v921, %v920
      %v930 = vld [vmem:[%s7] sm:$0xf]
      %v931 = vld [vmem:[%s7 + $0x4] sm:$0xf]
      %v932 = vld [vmem:[%s7 + $0x8] sm:$0xf]
      %v933 = vld [vmem:[%s7 + $0xc] sm:$0xf]
      %v934 = vld [vmem:[%s7 + $0x10] sm:$0xf]
      %v935 = vld [vmem:[%s7 + $0x14] sm:$0xf]
      %v936 = vld [vmem:[%s7 + $0x18] sm:$0xf]
      %v937 = vld [vmem:[%s7 + $0x1c] sm:$0xf]
      %v938 = vld [vmem:[%s7 + $0x20] sm:$0xf]
      %v939 = vld [vmem:[%s7 + $0x24] sm:$0xf]
      %v940 = vld [vmem:[%s7 + $0x28] sm:$0xf]
      %v941 = vld [vmem:[%s7 + $0x2c] sm:$0xf]
      %v942 = vld [vmem:[%s7 + $0x30] sm:$0xf]
      %v943 = vld [vmem:[%s7 + $0x34] sm:$0xf]
      %v944 = vld [vmem:[%s7 + $0x38] sm:$0xf]
      %v945 = vld [vmem:[%s7 + $0x3c] sm:$0xf]
      %v946 = vld [vmem:[%s8] sm:$0x1]
      %v948 = vlaneseq
      %v949 = vshrl.u32 %v948, 7
      %v950 = vsub.s32 0, %v949
      %v951 = vrot.slane %v946, %v950
      %v969 = vunpack.c.l.b16 %v930
      %v970 = vunpack.c.l.b16 %v931
      %v971 = vunpack.c.l.b16 %v932
      %v972 = vunpack.c.l.b16 %v933
      %v973 = vunpack.c.l.b16 %v934
      %v974 = vunpack.c.l.b16 %v935
      %v975 = vunpack.c.l.b16 %v936
      %v976 = vunpack.c.l.b16 %v937
      %v977 = vunpack.c.l.b16 %v938
      %v978 = vunpack.c.l.b16 %v939
      %v979 = vunpack.c.l.b16 %v940
      %v980 = vunpack.c.l.b16 %v941
      %v981 = vunpack.c.l.b16 %v942
      %v982 = vunpack.c.l.b16 %v943
      %v983 = vunpack.c.l.b16 %v944
      %v984 = vunpack.c.l.b16 %v945
      %v985 = vpack.c.b16 %v970, %v969
      %v986 = vpack.c.b16 %v972, %v971
      %v987 = vpack.c.b16 %v974, %v973
      %v988 = vpack.c.b16 %v976, %v975
      %v989 = vpack.c.b16 %v978, %v977
      %v990 = vpack.c.b16 %v980, %v979
      %v991 = vpack.c.b16 %v982, %v981
      %v992 = vpack.c.b16 %v984, %v983
      %1001 = vmatprep.subr.bf16.mxu0 0
      %1002 = vmatpush1.bf16.msra.mxu0 %v985
      %1003 = vmatprep.subr.bf16.mxu0 0
      %1004 = vmatpush1.bf16.msra.mxu0 %v986
      %1005 = vmatprep.subr.bf16.mxu0 0
      %1006 = vmatpush1.bf16.msra.mxu0 %v987
      %1007 = vmatprep.subr.bf16.mxu0 0
      %1008 = vmatpush1.bf16.msra.mxu0 %v988
      %1009 = vmatprep.subr.bf16.mxu0 0
      %1010 = vmatpush1.bf16.msra.mxu0 %v989
      %1011 = vmatprep.subr.bf16.mxu0 0
      %1012 = vmatpush1.bf16.msra.mxu0 %v990
      %1013 = vmatprep.subr.bf16.mxu0 0
      %1014 = vmatpush1.bf16.msra.mxu0 %v991
      %1015 = vmatprep.subr.bf16.mxu0 0
      %1016 = vmatpush1.bf16.msra.mxu0 %v992
      %1017 = vmatprep.subr.bf16.mxu0 0
      %1018 = vmatpush1.bf16.msra.mxu0 0
      %1019 = vmatprep.subr.bf16.mxu0 0
      %1020 = vmatpush1.bf16.msra.mxu0 0
      %1021 = vmatprep.subr.bf16.mxu0 0
      %1022 = vmatpush1.bf16.msra.mxu0 0
      %1023 = vmatprep.subr.bf16.mxu0 0
      %1024 = vmatpush1.bf16.msra.mxu0 0
      %1025 = vmatprep.subr.bf16.mxu0 0
      %1026 = vmatpush1.bf16.msra.mxu0 0
      %1027 = vmatprep.subr.bf16.mxu0 0
      %1028 = vmatpush1.bf16.msra.mxu0 0
      %1029 = vmatprep.subr.bf16.mxu0 0
      %1030 = vmatpush1.bf16.msra.mxu0 0
      %1031 = vmatprep.subr.bf16.mxu0 0
      %1032 = vmatpush1.bf16.msra.mxu0 0
      %1033 = vmatprep.mubr.bf16.mxu0 0
      %1034 = vmatmul.mubr.bf16.gmra.mrb[0].mxu0 %v922
      %v1035 = vpop.f32.mrb[0].mxu0
      %v1036 = vadd.f32 %v951, %v1035
      %v1037 = vpop.f32.mrb[0].mxu0
      %v1038 = vpop.f32.mrb[0].mxu0
      %v1039 = vadd.f32 %v951, %v1038
      %v1040 = vpop.f32.mrb[0].mxu0
      %1041 = vmatprep.mubr.bf16.mxu0 0
      %1042 = vmatmul.mubr.bf16.gmra.mrb[0].mxu0 %v923
      %v1043 = vpop.f32.mrb[0].mxu0
      %v1044 = vadd.f32 %v951, %v1043
      %v1045 = vpop.f32.mrb[0].mxu0
      %v1046 = vpop.f32.mrb[0].mxu0
      %v1047 = vadd.f32 %v951, %v1046
      %v1048 = vpop.f32.mrb[0].mxu0
      %1049 = vmatprep.mubr.bf16.mxu0 0
      %1050 = vmatmul.mubr.bf16.gmra.mrb[0].mxu0 %v924
      %v1051 = vpop.f32.mrb[0].mxu0
      %v1052 = vadd.f32 %v951, %v1051
      %v1053 = vpop.f32.mrb[0].mxu0
      %v1054 = vpop.f32.mrb[0].mxu0
      %v1055 = vadd.f32 %v951, %v1054
      %v1056 = vpop.f32.mrb[0].mxu0
      %1057 = vmatprep.mubr.bf16.mxu0 0
      %1058 = vmatmul.mubr.bf16.gmra.mrb[0].mxu0 %v925
      %v1059 = vpop.f32.mrb[0].mxu0
      %v1060 = vadd.f32 %v951, %v1059
      %v1061 = vpop.f32.mrb[0].mxu0
      %v1062 = vpop.f32.mrb[0].mxu0
      %v1063 = vadd.f32 %v951, %v1062
      %v1064 = vpop.f32.mrb[0].mxu0
      %1065 = vmatprep.mubr.bf16.mxu0 0
      %1066 = vmatmul.mubr.bf16.gmra.mrb[0].mxu0 %v926
      %v1067 = vpop.f32.mrb[0].mxu0
      %v1068 = vadd.f32 %v951, %v1067
      %v1069 = vpop.f32.mrb[0].mxu0
      %v1070 = vpop.f32.mrb[0].mxu0
      %v1071 = vadd.f32 %v951, %v1070
      %v1072 = vpop.f32.mrb[0].mxu0
      %1073 = vmatprep.mubr.bf16.mxu0 0
      %1074 = vmatmul.mubr.bf16.gmra.mrb[0].mxu0 %v927
      %v1075 = vpop.f32.mrb[0].mxu0
      %v1076 = vadd.f32 %v951, %v1075
      %v1077 = vpop.f32.mrb[0].mxu0
      %v1078 = vpop.f32.mrb[0].mxu0
      %v1079 = vadd.f32 %v951, %v1078
      %v1080 = vpop.f32.mrb[0].mxu0
      %1081 = vmatprep.mubr.bf16.mxu0 0
      %1082 = vmatmul.mubr.bf16.gmra.mrb[0].mxu0 %v928
      %v1083 = vpop.f32.mrb[0].mxu0
      %v1084 = vadd.f32 %v951, %v1083
      %v1085 = vpop.f32.mrb[0].mxu0
      %v1086 = vpop.f32.mrb[0].mxu0
      %v1087 = vadd.f32 %v951, %v1086
      %v1088 = vpop.f32.mrb[0].mxu0
      %1089 = vmatprep.mubr.bf16.mxu0 0
      %1090 = vmatmul.mubr.bf16.gmra.mrb[0].mxu0 %v929
      %v1091 = vpop.f32.mrb[0].mxu0
      %v1092 = vadd.f32 %v951, %v1091
      %v1093 = vpop.f32.mrb[0].mxu0
      %v1094 = vpop.f32.mrb[0].mxu0
      %v1095 = vadd.f32 %v951, %v1094
      %v1096 = vpop.f32.mrb[0].mxu0
      %1097 = vdwg.mxu0
      %1098 = vst [vmem:[%s334] sm:$0xff] %v1036
      %1099 = vst [vmem:[%s334 + $0x8] sm:$0xff] %v1039
      %1100 = vst [vmem:[%s334 + $0x10] sm:$0xff] %v1044
      %1101 = vst [vmem:[%s334 + $0x18] sm:$0xff] %v1047
      %1102 = vst [vmem:[%s334 + $0x20] sm:$0xff] %v1052
      %1103 = vst [vmem:[%s334 + $0x28] sm:$0xff] %v1055
      %1104 = vst [vmem:[%s334 + $0x30] sm:$0xff] %v1060
      %1105 = vst [vmem:[%s334 + $0x38] sm:$0xff] %v1063
      %1106 = vst [vmem:[%s334 + $0x40] sm:$0xff] %v1068
      %1107 = vst [vmem:[%s334 + $0x48] sm:$0xff] %v1071
      %1108 = vst [vmem:[%s334 + $0x50] sm:$0xff] %v1076
      %1109 = vst [vmem:[%s334 + $0x58] sm:$0xff] %v1079
      %1110 = vst [vmem:[%s334 + $0x60] sm:$0xff] %v1084
      %1111 = vst [vmem:[%s334 + $0x68] sm:$0xff] %v1087
      %1112 = vst [vmem:[%s334 + $0x70] sm:$0xff] %v1092
      %1113 = vst [vmem:[%s334 + $0x78] sm:$0xff] %v1095
      %s1114 = smul.u32 16, %s20
      %p1115 = scmp.lt.s32.totalorder %s1114, 31
      %s1116 = scalar_select %p1115, %s1114, 31
      %s1117 = smul.addr %s1116, 8
      %s1118 = scalar_lea.vmem %s9, %s1117
      // Predicated region
      $region57: #{_forward_impl.1} parent=55 // pred_check
        %p1119 = pneg %p232
      $region58: #{_forward_impl.1} parent=55 // pred_check_branch
        %1121 = sbr.rel (%p1119) target = $region60
      $region59: #{_forward_impl.1} parent=55 // pred_region
        %s1122 = smul.u32 16, %s20
      $region60: #{_forward_impl.1} parent=55 // pred_fallthru
        _
    $region56: #{_forward_impl.1} parent=5 // pred_fallthru
      _
    %p1123 = scmp.le.s32.totalorder 2, %s15
    // Predicated region
    $region61: #{_forward_impl.1} parent=5 // pred_check
      %p1124 = pneg %p1123
    $region62: #{_forward_impl.1} parent=5 // pred_check_branch
      %1126 = sbr.rel (%p1124) target = $region64
    $region63: #{_forward_impl.1} parent=5 // pred_region
      %s1127 = ssub.s32 %s15, 2
      // Predicated region
      $region65: #{_forward_impl.1} parent=63 // pred_check
        %p1128 = pneg %p238
      $region66: #{_forward_impl.1} parent=63 // pred_check_branch
        %1130 = sbr.rel (%p1128) target = $region68
      $region67: #{_forward_impl.1} parent=63 // pred_region
        %s1131 = smul.u32 16, %s21
        %p1132 = scmp.lt.s32.totalorder %s1131, 31
        %s1133 = scalar_select %p1132, %s1131, 31
        %s1134 = smul.addr %s1133, 8
        %s1135 = scalar_lea.vmem %s9, %s1134
      $region68: #{_forward_impl.1} parent=63 // pred_fallthru
        _
    $region64: #{_forward_impl.1} parent=5 // pred_fallthru
      _
  $region6: #{_forward_impl.1} parent=0 // loop_footer
    %s19 = sadd.s32 1, %s15
  $region7: #{_forward_impl.1} parent=0 // loop_footer_branch
    %14 = sbr.rel target = $region3
  $region8: #{_forward_impl.1} parent=0 // loop_exit
    _

</llo_original>
